<compile_context>
chip_gen: v5e
topology: v5e:2x2
jax: 0.10.0
libtpu: 0.0.40
codegen_flags: <defaults>
</compile_context>

<pallas_src>
import functools

import numpy as np

import jax
import jax.numpy as jnp
from jax.experimental import pallas as pl
from jax.experimental.pallas import tpu as pltpu


# ----------------------------------------------------------------------------
# helpers
# ----------------------------------------------------------------------------
def _round_up(x, m):
    return (x + m - 1) // m * m


@functools.lru_cache(maxsize=1)
def _max_tile_m():
    # v5* MXU is 128x128 -> tm=128 loses nothing and saves VMEM; v6e/v7x: 256.
    try:
        kind = jax.devices()[0].device_kind.lower()
    except Exception:
        kind = ""
    return 128 if "v5" in kind else 256


def _row_tiling(m):
    tm = min(_max_tile_m(), _round_up(max(m, 1), 8))
    return tm, _round_up(m, tm)


def _pad_rows(x, mp):
    m = x.shape[0]
    if mp == m:
        return x
    return jnp.pad(x, ((0, mp - m), (0, 0)))


def _const_spec(shape):
    # block == full array, resident across grid steps (constant index_map)
    return pl.BlockSpec(shape, lambda i: (0,) * len(shape))


def _row_spec(tm, ncol):
    return pl.BlockSpec((tm, ncol), lambda i: (i, 0))


def _vmem_limit(operands, out_bytes, mult=4):
    # Explicit VMEM budget (review): cover operands (double-buffered) +
    # intermediates, capped at 64 MiB so it fits v7x's 64 MiB/TC physical VMEM.
    in_bytes = sum(int(o.size) * o.dtype.itemsize for o in operands)
    return int(min(64 << 20, max(32 << 20, mult * (in_bytes + out_bytes))))


# ----------------------------------------------------------------------------
# Kernel 1: fused multi-layer Linear(+ReLU) chain (box_head, spatial pipeline)
# ----------------------------------------------------------------------------
def _mlp_kernel(*refs, relu_flags):
    x_ref = refs[0]
    out_ref = refs[-1]
    y = x_ref[...]
    for li, relu in enumerate(relu_flags):
        w = refs[1 + 2 * li][...]
        b = refs[2 + 2 * li][...]
        y = jnp.dot(y.astype(jnp.bfloat16), w, preferred_element_type=jnp.float32) + b
        if relu:
            y = jnp.maximum(y, 0.0)
    out_ref[...] = y.astype(out_ref.dtype)


def pallas_mlp(x, layers, relu_flags, out_dtype=jnp.float32):
    """layers: sequence of (w (K,N) bf16, b (1,N) f32). All layers chained in VMEM."""
    m, k = x.shape
    tm, mp = _row_tiling(m)
    xp = _pad_rows(x, mp)
    n_out = layers[-1][0].shape[1]

    operands = [xp]
    in_specs = [_row_spec(tm, k)]
    for w, b in layers:
        operands.extend([w, b])
        in_specs.extend([_const_spec(w.shape), _const_spec(b.shape)])

    out_bytes = mp * n_out * np.dtype(out_dtype).itemsize
    out = pl.pallas_call(
        functools.partial(_mlp_kernel, relu_flags=tuple(relu_flags)),
        out_shape=jax.ShapeDtypeStruct((mp, n_out), out_dtype),
        grid=(mp // tm,),
        in_specs=in_specs,
        out_specs=_row_spec(tm, n_out),
        compiler_params=pltpu.CompilerParams(
            dimension_semantics=("parallel",),
            vmem_limit_bytes=_vmem_limit(operands, out_bytes)),
    )(*operands)
    return out[:m] if mp != m else out


# ----------------------------------------------------------------------------
# Kernel 2: fused message passing (all num_iter iterations in one call)
#   attention-MBF -> adjacency -> softmax -> message-MBF (both directions)
#   -> weighted aggregation -> residual -> LayerNorm, all in VMEM.
# ----------------------------------------------------------------------------
def _message_passing_kernel(
        h_ref, o_ref, attn_s_ref, o2s_s_ref, s2o_s_ref,
        sel_h_ref, sel_o_ref, sel_ht_ref, sel_ot_ref,
        sel_h2_ref, sel_h2t_ref, sel_o2t_ref,
        a_w1h_ref, a_w1o_ref, a_b1_ref, a_w3_ref, a_b3_ref,
        adj_w_ref, adj_b_ref,
        o2s_w1_ref, o2s_b1_ref, o2s_w3_ref, o2s_b3_ref,
        s2o_w1_ref, s2o_b1_ref, s2o_w3_ref, s2o_b3_ref,
        lnh_g_ref, lnh_b_ref, lno_g_ref, lno_b_ref,
        h_out_ref, o_out_ref,
        *, num_iter, eps):
    f32 = jnp.float32
    bf16 = jnp.bfloat16

    def mxu(a, b):                       # bf16 matmul, f32 accumulation
        return jnp.dot(a.astype(bf16), b.astype(bf16), preferred_element_type=f32)

    def fdot(a, b):                      # tiny exact f32 matmuls only
        return jnp.dot(a.astype(f32), b.astype(f32), preferred_element_type=f32)

    def layernorm(x, g, b):
        mu = jnp.mean(x, axis=-1, keepdims=True)
        var = jnp.mean(jnp.square(x - mu), axis=-1, keepdims=True)
        return (x - mu) * jax.lax.rsqrt(var + eps) * g + b

    def softmax_rows(x):                 # f32 logits; EUP approx reciprocal
        m = jnp.max(x, axis=-1, keepdims=True)
        e = jnp.exp(x - m)
        return e * pl.reciprocal(jnp.sum(e, axis=-1, keepdims=True), approx=True)

    # selection matrices (0/1) arrive in bf16 (exact).  Keep bf16 copies for the
    # MXU broadcast matmuls; hoist f32 copies once for the exact logit scatter /
    # softmax-weight expansion (tiny matrices).
    sel_h_b = sel_h_ref[...]       # (P, n_h)  p -> human index p // n_o
    sel_o_b = sel_o_ref[...]       # (P, n_o)  p -> object index p %  n_o
    sel_h2_b = sel_h2_ref[...]     # (P, n_h)  (o,h)-order: q -> human q % n_h
    sel_h_f = sel_h_b.astype(f32)
    sel_o_f = sel_o_b.astype(f32)
    sel_ht_f = sel_ht_ref[...].astype(f32)    # (n_h, P)
    sel_ot_f = sel_ot_ref[...].astype(f32)    # (n_o, P)
    sel_h2t_f = sel_h2t_ref[...].astype(f32)  # (n_h, P)
    sel_o2t_f = sel_o2t_ref[...].astype(f32)  # (n_o, P)  (o,h)-order: q // n_h

    attn_s = attn_s_ref[...]     # bf16 fc_2(spatial) of attention head, (P, rep)
    o2s_s = o2s_s_ref[...]       # bf16 fc_2(spatial) of obj_to_sub, (h,o) order
    s2o_s = s2o_s_ref[...]       # bf16 fc_2(spatial) of sub_to_obj, (o,h) order
    adj_w = adj_w_ref[...]       # f32 (1, rep)
    adj_b = adj_b_ref[...]       # f32 (1, 1)
    a_b1 = a_b1_ref[...]
    a_b3 = a_b3_ref[...]

    def one_iter(h, o):
        # ---- attention MBF + adjacency logits ----
        hA = (mxu(h, a_w1h_ref[...]) + a_b1).astype(bf16)   # fc_1 bias folded
        oA = mxu(o, a_w1o_ref[...]).astype(bf16)
        h1 = mxu(sel_h_b, hA) + mxu(sel_o_b, oA)            # pair broadcast (exact copy)
        gate = jnp.maximum(h1.astype(bf16) * attn_s, 0.0)   # bf16 (P, rep)
        wts = jnp.maximum(mxu(gate, a_w3_ref[...]) + a_b3, 0.0)          # f32 (P, rep)
        logits = jnp.sum(wts * adj_w, axis=-1, keepdims=True) + adj_b    # f32 (P, 1)
        # exact f32 scatter of pair logits into the (n_h, n_o) adjacency (tiny)
        adj = fdot(sel_ht_f, sel_o_f * logits)               # (n_h, n_o)
        adj_t = fdot(sel_ot_f, sel_h_f * logits)             # (n_o, n_h)

        # ---- messages object -> subject, aggregate, residual + LayerNorm ----
        p_h = softmax_rows(adj)                                          # f32
        oB = (mxu(o, o2s_w1_ref[...]) + o2s_b1_ref[...]).astype(bf16)    # (n_o, rep)
        gate2 = jnp.maximum(mxu(sel_o_b, oB).astype(bf16) * o2s_s, 0.0)  # bf16 (P, rep)
        w_agg = fdot(p_h, sel_ot_f) * sel_ht_f               # f32 (n_h, P) softmax wts
        agg_h = mxu(w_agg, gate2)                            # weighted sum (fc_3 commutes)
        msg_h = mxu(agg_h, o2s_w3_ref[...]) + o2s_b3_ref[...]
        h = layernorm(h + jnp.maximum(msg_h, 0.0), lnh_g_ref[...], lnh_b_ref[...])

        # ---- messages subject -> object (uses the updated h) ----
        p_o = softmax_rows(adj_t)
        hB = (mxu(h, s2o_w1_ref[...]) + s2o_b1_ref[...]).astype(bf16)    # (n_h, rep)
        gate3 = jnp.maximum(mxu(sel_h2_b, hB).astype(bf16) * s2o_s, 0.0)
        w_agg2 = fdot(p_o, sel_h2t_f) * sel_o2t_f            # (n_o, P)
        agg_o = mxu(w_agg2, gate3)
        msg_o = mxu(agg_o, s2o_w3_ref[...]) + s2o_b3_ref[...]
        o = layernorm(o + jnp.maximum(msg_o, 0.0), lno_g_ref[...], lno_b_ref[...])
        return h, o

    h = h_ref[...]
    o = o_ref[...]
    if num_iter <= 3:
        for _ in range(num_iter):           # small fixed count: unrolled
            h, o = one_iter(h, o)
    else:
        h, o = jax.lax.fori_loop(0, num_iter, lambda it, c: one_iter(*c), (h, o))

    h_out_ref[...] = h
    o_out_ref[...] = o


def pallas_message_passing(h_enc, o_enc, attn_s, o2s_s, s2o_s, sels, params,
                           num_iter, eps=1e-5):
    attn = params["attn"]
    o2s = params["o2s"]
    s2o = params["s2o"]
    operands = [h_enc, o_enc, attn_s, o2s_s, s2o_s, *sels,
                attn["w1h"], attn["w1o"], attn["b1"], attn["w3"], attn["b3"],
                params["adj_w"], params["adj_b"],
                o2s["w1"], o2s["b1"], o2s["w3"], o2s["b3"],
                s2o["w1"], s2o["b1"], s2o["w3"], s2o["b3"],
                params["ln_h"][0], params["ln_h"][1],
                params["ln_o"][0], params["ln_o"][1]]
    in_specs = [_const_spec(op.shape) for op in operands]
    out_shape = (jax.ShapeDtypeStruct(h_enc.shape, jnp.float32),
                 jax.ShapeDtypeStruct(o_enc.shape, jnp.float32))
    out_specs = (_const_spec(h_enc.shape), _const_spec(o_enc.shape))
    out_bytes = sum(int(np.prod(s.shape)) * 4 for s in out_shape)
    return pl.pallas_call(
        functools.partial(_message_passing_kernel, num_iter=num_iter, eps=eps),
        out_shape=out_shape,
        grid=(1,),
        in_specs=in_specs,
        out_specs=out_specs,
        compiler_params=pltpu.CompilerParams(
            vmem_limit_bytes=_vmem_limit(operands, out_bytes)),
    )(*operands)


# ----------------------------------------------------------------------------
# Kernel 3: fused final pair features (attention_head + attention_head_g)
# writes a lane-dense (P, 2*rep) output in one call; the two halves are stored
# directly (no concat temporary); fc_1(global) is hoisted to the wrapper.
# ----------------------------------------------------------------------------
def _pair_feature_kernel(h_ref, o_ref, attn_s_ref, g_s_ref, gA_ref,
                         sel_h_ref, sel_o_ref,
                         a_w1h_ref, a_w1o_ref, a_b1_ref, a_w3_ref, a_b3_ref,
                         g_w3_ref, g_b3_ref,
                         out_ref, *, rep):
    f32 = jnp.float32
    bf16 = jnp.bfloat16

    def mxu(a, b):
        return jnp.dot(a.astype(bf16), b.astype(bf16), preferred_element_type=f32)

    # local attention head (pair appearance = [h_i, o_j])
    hA = (mxu(h_ref[...], a_w1h_ref[...]) + a_b1_ref[...]).astype(bf16)
    oA = mxu(o_ref[...], a_w1o_ref[...]).astype(bf16)
    h1 = mxu(sel_h_ref[...], hA) + mxu(sel_o_ref[...], oA)
    gate = jnp.maximum(h1.astype(bf16) * attn_s_ref[...], 0.0)
    out_ref[:, 0:rep] = jnp.maximum(mxu(gate, a_w3_ref[...]) + a_b3_ref[...], 0.0)

    # global attention head: fc_1(global) is grid-invariant (precomputed, gA_ref)
    gate_g = jnp.maximum(gA_ref[...] * g_s_ref[...], 0.0)
    out_ref[:, rep:2 * rep] = jnp.maximum(mxu(gate_g, g_w3_ref[...]) + g_b3_ref[...], 0.0)


def pallas_pair_features(h_enc, o_enc, attn_s, g_s, gA, sel_h, sel_o, attn, attn_g):
    p, rep = attn_s.shape
    n_h = h_enc.shape[0]
    n_o = o_enc.shape[0]
    tm, pp = _row_tiling(p)
    attn_s_p = _pad_rows(attn_s, pp)
    g_s_p = _pad_rows(g_s, pp)
    sel_h_p = _pad_rows(sel_h, pp)
    sel_o_p = _pad_rows(sel_o, pp)

    operands = [h_enc, o_enc, attn_s_p, g_s_p, gA, sel_h_p, sel_o_p,
                attn["w1h"], attn["w1o"], attn["b1"], attn["w3"], attn["b3"],
                attn_g["w3"], attn_g["b3"]]
    in_specs = [_const_spec(h_enc.shape), _const_spec(o_enc.shape),
                _row_spec(tm, rep), _row_spec(tm, rep),
                _const_spec(gA.shape),
                _row_spec(tm, n_h), _row_spec(tm, n_o),
                _const_spec(attn["w1h"].shape), _const_spec(attn["w1o"].shape),
                _const_spec(attn["b1"].shape), _const_spec(attn["w3"].shape),
                _const_spec(attn["b3"].shape),
                _const_spec(attn_g["w3"].shape), _const_spec(attn_g["b3"].shape)]
    out_bytes = pp * 2 * rep * 4
    out = pl.pallas_call(
        functools.partial(_pair_feature_kernel, rep=rep),
        out_shape=jax.ShapeDtypeStruct((pp, 2 * rep), jnp.float32),
        grid=(pp // tm,),
        in_specs=in_specs,
        out_specs=_row_spec(tm, 2 * rep),
        compiler_params=pltpu.CompilerParams(
            dimension_semantics=("parallel",),
            vmem_limit_bytes=_vmem_limit(operands, out_bytes)),
    )(*operands)
    return out[:p] if pp != p else out


# ----------------------------------------------------------------------------
# Parameter init (deterministic, synthetic).  Weights stored bf16, biases f32.
# ----------------------------------------------------------------------------
def _init_linear(key, fan_in, fan_out):
    kw, kb = jax.random.split(key)
    w = (jax.random.normal(kw, (fan_in, fan_out), jnp.float32) * 0.02).astype(jnp.bfloat16)
    b = (jax.random.normal(kb, (fan_out,), jnp.float32) * 0.02).reshape(1, fan_out)
    return w, b


def _init_mbf(key, appearance_size, spatial_size, representation_size, cardinality=16):
    assert representation_size % cardinality == 0
    k1, k2, k3 = jax.random.split(key, 3)
    # branch weights stacked along the hidden axis: fc_1 -> (Da, card*sub),
    # fc_2 -> (Ds, card*sub), fc_3 -> (card*sub, rep); summed fc_3 bias.
    w1, b1 = _init_linear(k1, appearance_size, representation_size)
    w2, b2 = _init_linear(k2, spatial_size, representation_size)
    w3, b3 = _init_linear(k3, representation_size, representation_size)
    return dict(w1=w1, b1=b1, w2=w2, b2=b2, w3=w3, b3=b3)


# ----------------------------------------------------------------------------
# compute_spatial_encodings stand-in (external helper, not in module source)
# ----------------------------------------------------------------------------
def compute_spatial_encodings(boxes_h, boxes_o, shape):
    # TODO(synk): the real compute_spatial_encodings lives in an external package
    # (pocket.models); deterministic stand-in with the same output dim (36).
    H, W = shape
    eps = 1e-6
    scale = jnp.array([W, H, W, H], jnp.float32)
    bh = boxes_h / scale
    bo = boxes_o / scale
    ch = jnp.stack([(bh[:, 0] + bh[:, 2]) * 0.5, (bh[:, 1] + bh[:, 3]) * 0.5], axis=1)
    co = jnp.stack([(bo[:, 0] + bo[:, 2]) * 0.5, (bo[:, 1] + bo[:, 3]) * 0.5], axis=1)
    wh_h = bh[:, 2:] - bh[:, :2]
    wh_o = bo[:, 2:] - bo[:, :2]
    a_h = wh_h[:, 0] * wh_h[:, 1]
    a_o = wh_o[:, 0] * wh_o[:, 1]
    lt = jnp.maximum(bh[:, :2], bo[:, :2])
    rb = jnp.minimum(bh[:, 2:], bo[:, 2:])
    inter = jnp.prod(jnp.clip(rb - lt, 0.0, None), axis=1)
    union = a_h + a_o - inter
    iou = inter / (union + eps)
    d = jnp.abs(ch - co)
    dist = jnp.sqrt(jnp.sum(jnp.square(ch - co), axis=1) + eps)
    f = jnp.concatenate([
        ch, co, wh_h, wh_o,
        a_h[:, None], a_o[:, None],
        (wh_h[:, 0] / (wh_h[:, 1] + eps))[:, None],
        (wh_o[:, 0] / (wh_o[:, 1] + eps))[:, None],
        (a_h / (a_o + eps))[:, None],
        iou[:, None], d, dist[:, None], union[:, None],
    ], axis=1)                                    # (P, 18)
    return jnp.concatenate([f, jnp.log(f + eps)], axis=1)   # (P, 36)


# ----------------------------------------------------------------------------
# Per-image pipeline (jitted; n_h / n_o / num_iter / image size are static)
# ----------------------------------------------------------------------------
@functools.partial(jax.jit, static_argnames=("n_h", "n_o", "num_iter", "image_hw"))
def _process_image(params, h_enc, o_enc, sbj_coords, obj_coords, gfeat,
                   *, n_h, n_o, num_iter, image_hw):
    rep = params["attn"]["w3"].shape[1]
    num_pairs = n_h * n_o
    x_keep = np.repeat(np.arange(n_h), n_o)
    y_keep = np.tile(np.arange(n_o), n_h)

    # fused spatial pipeline: 36->128->256->1024 (ReLU) -> packed fc_2
    # projections of the four MBF heads (iteration-invariant, computed once).
    # bf16 output halves the (P, 4*rep) VMEM / DMA footprint.
    sp36 = compute_spatial_encodings(sbj_coords[x_keep], obj_coords[y_keep], image_hw)
    proj = pallas_mlp(sp36, params["spatial"], (True, True, True, False),
                      out_dtype=jnp.bfloat16)                              # (P, 4*rep)
    attn_s = proj[:, 0 * rep:1 * rep]
    g_s = proj[:, 1 * rep:2 * rep]
    o2s_s = proj[:, 2 * rep:3 * rep]
    s2o_s = proj[:, 3 * rep:4 * rep].reshape(n_h, n_o, rep).transpose(1, 0, 2).reshape(num_pairs, rep)

    # one-hot pair-selection matrices (constants under jit, exact in bf16);
    # pair broadcast / aggregation become bf16 MXU matmuls instead of HBM tiles.
    p_idx = np.arange(num_pairs)

    def _sel(mat):
        return jnp.asarray(mat.astype(np.float32), dtype=jnp.bfloat16)

    sel_h = (p_idx[:, None] // n_o == np.arange(n_h)[None, :])
    sel_o = (p_idx[:, None] % n_o == np.arange(n_o)[None, :])
    sel_h2 = (p_idx[:, None] % n_h == np.arange(n_h)[None, :])
    sel_o2t = (p_idx[None, :] // n_h == np.arange(n_o)[:, None])
    sels = (_sel(sel_h), _sel(sel_o), _sel(sel_h.T), _sel(sel_o.T),
            _sel(sel_h2), _sel(sel_h2.T), _sel(sel_o2t))

    h_fin, o_fin = pallas_message_passing(h_enc, o_enc, attn_s, o2s_s, s2o_s,
                                          sels, params, num_iter)

    # attention_head_g fc_1 of the global feature is pair-invariant: hoisted here.
    gA = (jnp.dot(gfeat, params["attn_g"]["w1"].astype(jnp.float32))
          + params["attn_g"]["b1"]).astype(jnp.bfloat16)                   # (1, rep)

    pair_feat = pallas_pair_features(h_fin, o_fin, attn_s, g_s, gA,
                                     sels[0], sels[1],
                                     params["attn"], params["attn_g"])

    return (pair_feat, h_fin[x_keep], o_fin[y_keep],
            sbj_coords[x_keep], obj_coords[y_keep])


# ----------------------------------------------------------------------------
# GraphHead
# ----------------------------------------------------------------------------
class GraphHead:
    def __init__(self, backbone_name, out_channels, roi_pool_size, node_encoding_size,
                 representation_size, num_cls, num_obj_cls,
                 fg_iou_thresh=0.5, ignore_iou_thresh=0.5, num_iter=2, *, key):
        assert backbone_name in ("CLIP_ViT_32", "CLIP_ViT_16", "CLIP_ViT_14"), \
            "only the CLIP-ViT box_head / attention_head_g branch is implemented"
        assert node_encoding_size == representation_size, \
            "residual message update requires node_encoding_size == representation_size"
        self.backbone_name = backbone_name
        self.out_channels = out_channels
        self.roi_pool_size = roi_pool_size
        self.node_encoding_size = node_encoding_size
        self.representation_size = representation_size
        self.num_cls = num_cls
        self.num_obj_cls = num_obj_cls
        self.num_iter = num_iter

        enc = node_encoding_size
        rep = representation_size
        ks = jax.random.split(key, 10)
        bh1 = _init_linear(ks[0], out_channels, enc)
        bh2 = _init_linear(ks[1], enc, enc)
        sp1 = _init_linear(ks[2], 36, 128)
        sp2 = _init_linear(ks[3], 128, 256)
        sp3 = _init_linear(ks[4], 256, 1024)
        adj_w = jax.random.normal(ks[5], (1, rep), jnp.float32) * 0.02
        adj_b = jax.random.normal(jax.random.fold_in(ks[5], 1), (1, 1), jnp.float32) * 0.02
        attn = _init_mbf(ks[6], 2 * enc, 1024, rep)
        attn_g = _init_mbf(ks[7], out_channels, 1024, rep)
        o2s = _init_mbf(ks[8], enc, 1024, rep)      # obj_to_sub (messages to humans)
        s2o = _init_mbf(ks[9], enc, 1024, rep)      # sub_to_obj (messages to objects)

        # pack the four iteration-invariant fc_2 projections into the spatial pipeline
        w2_all = jnp.concatenate([attn["w2"], attn_g["w2"], o2s["w2"], s2o["w2"]], axis=1)
        b2_all = jnp.concatenate([attn["b2"], attn_g["b2"], o2s["b2"], s2o["b2"]], axis=1)

        self.params = {
            "box_head": ((bh1[0], bh1[1]), (bh2[0], bh2[1])),
            "spatial": (sp1, sp2, sp3, (w2_all, b2_all)),
            "attn": {"w1h": attn["w1"][:enc], "w1o": attn["w1"][enc:],
                     "b1": attn["b1"], "w3": attn["w3"], "b3": attn["b3"]},
            "attn_g": {"w1": attn_g["w1"], "b1": attn_g["b1"],
                       "w3": attn_g["w3"], "b3": attn_g["b3"]},
            "o2s": {"w1": o2s["w1"], "b1": o2s["b1"], "w3": o2s["w3"], "b3": o2s["b3"]},
            "s2o": {"w1": s2o["w1"], "b1": s2o["b1"], "w3": s2o["w3"], "b3": s2o["b3"]},
            "adj_w": adj_w, "adj_b": adj_b,
            "ln_h": (jnp.ones((1, enc), jnp.float32), jnp.zeros((1, enc), jnp.float32)),
            "ln_o": (jnp.ones((1, enc), jnp.float32), jnp.zeros((1, enc), jnp.float32)),
        }

    def forward(self, features, image_shapes, box_features, box_coords, box_labels,
                targets=None, indicators=None):
        global_features = features["global"]                      # (B, out_channels)
        # fused 2-layer box head over every box of the batch in one pallas_call
        box_features = pallas_mlp(box_features, self.params["box_head"], (True, True))

        counter = 0
        all_boxes_h, all_boxes_o = [], []
        all_subject_labels, all_object_labels = [], []
        all_labels, all_file_names = [], []
        all_box_h_features, all_box_o_features, all_box_pair_features = [], [], []

        for b_idx, (coords, labels, indicator) in enumerate(zip(box_coords, box_labels, indicators)):
            n = coords.shape[0]
            # TODO(synk): pad (n_h, n_o) to a static per-image budget with a validity
            # mask so the whole batch runs under one trace; this host sync recompiles
            # per distinct pair count and leaves one v7x TensorCore idle.
            n_h = int(jnp.sum(indicator > 0))
            n_o = n - n_h
            if n_h == 0 or n_o == 0:
                raise ValueError("There are no valid human-object pairs")

            sbj_coords = coords[:n_h]
            obj_coords = coords[n - n_o:]
            node_encodings = box_features[counter:counter + n]
            h_enc = node_encodings[:n_h]
            o_enc = node_encodings[n - n_o:]
            gfeat = global_features[b_idx][None, :]

            pair_feat, h_pairs, o_pairs, boxes_h, boxes_o = _process_image(
                self.params, h_enc, o_enc, sbj_coords, obj_coords, gfeat,
                n_h=n_h, n_o=n_o, num_iter=self.num_iter,
                image_hw=tuple(image_shapes[b_idx]))

            # TODO(synk): associate_with_ground_truth (box IoU + dynamic nonzero
            # indexing) has no static-shape Pallas equivalent; inference path keeps
            # all pairs.
            all_box_pair_features.append(pair_feat)
            all_box_h_features.append(h_pairs)
            all_box_o_features.append(o_pairs)
            all_boxes_h.append(boxes_h)
            all_boxes_o.append(boxes_o)
            counter += n

        return (box_features, all_box_h_features, all_box_o_features, all_box_pair_features,
                all_boxes_h, all_boxes_o, all_subject_labels, all_object_labels,
                all_labels, all_file_names)


# ----------------------------------------------------------------------------
# Main
# ----------------------------------------------------------------------------
if __name__ == "__main__":
    key = jax.random.PRNGKey(0)
    B = 2
    out_channels = 32
    enc = 64            # node_encoding_size
    rep = 64            # representation_size (== enc for the residual message update)
    n_per_image = 6
    n_h_demo = 2
    H, W = 64, 64

    head = GraphHead("CLIP_ViT_32", out_channels, 7, enc, rep,
                     num_cls=8, num_obj_cls=10, num_iter=2, key=key)

    k1, k2, k3 = jax.random.split(jax.random.PRNGKey(0), 3)
    box_features = jax.random.normal(k1, (B * n_per_image, out_channels), jnp.float32)
    features = {"global": jax.random.normal(k2, (B, out_channels), jnp.float32)}
    image_shapes = [(H, W)] * B

    box_coords, box_labels, indicators = [], [], []
    for b in range(B):
        kk = jax.random.fold_in(k3, b)
        xy1 = jax.random.uniform(kk, (n_per_image, 2), minval=0.0, maxval=W / 2.0)
        wh = jax.random.uniform(jax.random.fold_in(kk, 1), (n_per_image, 2),
                                minval=4.0, maxval=W / 2.0)
        coords = jnp.concatenate([xy1, xy1 + wh], axis=1).astype(jnp.float32)
        box_coords.append(coords)
        box_labels.append(jnp.arange(n_per_image, dtype=jnp.int32) % 10)
        indicators.append(jnp.concatenate([jnp.ones((n_h_demo,), jnp.int32),
                                           jnp.zeros((n_per_image - n_h_demo,), jnp.int32)]))

    outs = head.forward(features, image_shapes, box_features, box_coords, box_labels,
                        targets=None, indicators=indicators)

    jax.block_until_ready(outs[0])
    for t in outs[1] + outs[2] + outs[3] + outs[4] + outs[5]:
        jax.block_until_ready(t)
    print("KERNEL_OK")
</pallas_src>

<mosaic_0001>
module attributes {stable_mosaic.version = 11 : i64} {
  func.func @_mlp_kernel(%arg0: i32, %arg1: memref<16x32xf32, #tpu.memory_space<vmem>>, %arg2: memref<32x64xbf16, #tpu.memory_space<vmem>>, %arg3: memref<1x64xf32, #tpu.memory_space<vmem>>, %arg4: memref<64x64xbf16, #tpu.memory_space<vmem>>, %arg5: memref<1x64xf32, #tpu.memory_space<vmem>>, %arg6: memref<16x64xf32, #tpu.memory_space<vmem>>) attributes {dimension_semantics = [#tpu.dimension_semantics<parallel>], iteration_bounds = array<i64: 1>, scalar_prefetch = 0 : i64, scratch_operands = 0 : i64, tpu.core_type = #tpu.core_type<tc>, window_params = [{transform_indices = @transform_0, window_bounds = array<i64: 16, 32>}, {pipeline_mode = #tpu.pipeline_mode<synchronous>, transform_indices = @transform_1, window_bounds = array<i64: 32, 64>}, {pipeline_mode = #tpu.pipeline_mode<synchronous>, transform_indices = @transform_2, window_bounds = array<i64: 1, 64>}, {pipeline_mode = #tpu.pipeline_mode<synchronous>, transform_indices = @transform_3, window_bounds = array<i64: 64, 64>}, {pipeline_mode = #tpu.pipeline_mode<synchronous>, transform_indices = @transform_4, window_bounds = array<i64: 1, 64>}, {transform_indices = @transform_5, window_bounds = array<i64: 16, 64>}]} {
    %c0 = arith.constant 0 : index
    %c0_0 = arith.constant 0 : index
    %0 = vector.load %arg1[%c0, %c0_0] : memref<16x32xf32, #tpu.memory_space<vmem>>, vector<16x32xf32>
    %c0_1 = arith.constant 0 : index
    %c0_2 = arith.constant 0 : index
    %1 = vector.load %arg2[%c0_1, %c0_2] : memref<32x64xbf16, #tpu.memory_space<vmem>>, vector<32x64xbf16>
    %c0_3 = arith.constant 0 : index
    %c0_4 = arith.constant 0 : index
    %2 = vector.load %arg3[%c0_3, %c0_4] : memref<1x64xf32, #tpu.memory_space<vmem>>, vector<1x64xf32>
    %3 = arith.truncf %0 : vector<16x32xf32> to vector<16x32xbf16>
    %cst = arith.constant dense<0.000000e+00> : vector<16x64xf32>
    %4 = tpu.matmul %3, %1, %cst {dimension_numbers = #tpu.dot_dimension_numbers<[1], [0], [0], [1], [0, 0, 1, 1], [], []>} : vector<16x32xbf16>, vector<32x64xbf16>, vector<16x64xf32> -> vector<16x64xf32>
    %5 = vector.broadcast %2 : vector<1x64xf32> to vector<16x64xf32>
    %6 = arith.addf %4, %5 : vector<16x64xf32>
    %cst_5 = arith.constant 0.000000e+00 : f32
    %7 = vector.broadcast %cst_5 : f32 to vector<16x64xf32>
    %8 = arith.maximumf %6, %7 : vector<16x64xf32>
    %c0_6 = arith.constant 0 : index
    %c0_7 = arith.constant 0 : index
    %9 = vector.load %arg4[%c0_6, %c0_7] : memref<64x64xbf16, #tpu.memory_space<vmem>>, vector<64x64xbf16>
    %c0_8 = arith.constant 0 : index
    %c0_9 = arith.constant 0 : index
    %10 = vector.load %arg5[%c0_8, %c0_9] : memref<1x64xf32, #tpu.memory_space<vmem>>, vector<1x64xf32>
    %11 = arith.truncf %8 : vector<16x64xf32> to vector<16x64xbf16>
    %cst_10 = arith.constant dense<0.000000e+00> : vector<16x64xf32>
    %12 = tpu.matmul %11, %9, %cst_10 {dimension_numbers = #tpu.dot_dimension_numbers<[1], [0], [0], [1], [0, 0, 1, 1], [], []>} : vector<16x64xbf16>, vector<64x64xbf16>, vector<16x64xf32> -> vector<16x64xf32>
    %13 = vector.broadcast %10 : vector<1x64xf32> to vector<16x64xf32>
    %14 = arith.addf %12, %13 : vector<16x64xf32>
    %cst_11 = arith.constant 0.000000e+00 : f32
    %15 = vector.broadcast %cst_11 : f32 to vector<16x64xf32>
    %16 = arith.maximumf %14, %15 : vector<16x64xf32>
    %c0_12 = arith.constant 0 : index
    %c0_13 = arith.constant 0 : index
    %17 = vector.load %arg6[%c0_12, %c0_13] : memref<16x64xf32, #tpu.memory_space<vmem>>, vector<16x64xf32>
    tpu.vector_store %arg6[%c0_12, %c0_13], %16 {strides = array<i32>} : memref<16x64xf32, #tpu.memory_space<vmem>>, vector<16x64xf32>,
    return
  }
  func.func @transform_0(%arg0: i32) -> (i32, i32) {
    %c0_i32 = arith.constant 0 : i32
    %c0_i32_0 = arith.constant 0 : i32
    return %arg0, %c0_i32 : i32, i32
  }
  func.func @transform_1(%arg0: i32) -> (i32, i32) {
    %c0_i32 = arith.constant 0 : i32
    %c0_i32_0 = arith.constant 0 : i32
    %c0_i32_1 = arith.constant 0 : i32
    return %c0_i32, %c0_i32_0 : i32, i32
  }
  func.func @transform_2(%arg0: i32) -> (i32, i32) {
    %c0_i32 = arith.constant 0 : i32
    %c0_i32_0 = arith.constant 0 : i32
    %c0_i32_1 = arith.constant 0 : i32
    return %c0_i32, %c0_i32_0 : i32, i32
  }
  func.func @transform_3(%arg0: i32) -> (i32, i32) {
    %c0_i32 = arith.constant 0 : i32
    %c0_i32_0 = arith.constant 0 : i32
    %c0_i32_1 = arith.constant 0 : i32
    return %c0_i32, %c0_i32_0 : i32, i32
  }
  func.func @transform_4(%arg0: i32) -> (i32, i32) {
    %c0_i32 = arith.constant 0 : i32
    %c0_i32_0 = arith.constant 0 : i32
    %c0_i32_1 = arith.constant 0 : i32
    return %c0_i32, %c0_i32_0 : i32, i32
  }
  func.func @transform_5(%arg0: i32) -> (i32, i32) {
    %c0_i32 = arith.constant 0 : i32
    %c0_i32_0 = arith.constant 0 : i32
    return %arg0, %c0_i32 : i32, i32
  }
}

</mosaic_0001>

<llo_original>
// kernel: tpu_custom_call.1
$region0: #{tpu_custom_call.1}
  #allocation0 [shape = 'u32[]', space=smem, size = 0x4, offset = 0x4, fixed_abs, tag = 'smem constant byte address 0x4 - core index']
  #allocation1 [shape = 'u32[72,128]{1,0:T(1,128)}', space=vmem, size = 0x9000, scoped, tag = 'internal scratch']
  %s0 = inlined_call_operand.hbm [shape: f32[16,32], index: 0, kind: input, shape index: {}]
  %s1 = inlined_call_operand.hbm [shape: bf16[32,64], index: 1, kind: input, shape index: {}]
  %s2 = inlined_call_operand.vmem [shape: f32[1,64], index: 2, kind: input, shape index: {}]
  %s3 = inlined_call_operand.hbm [shape: bf16[64,64], index: 3, kind: input, shape index: {}]
  %s4 = inlined_call_operand.vmem [shape: f32[1,64], index: 4, kind: input, shape index: {}]
  %s5 = inlined_call_operand.hbm [shape: f32[16,64], index: 5, kind: output, shape index: {}]
  %s6 = sld [smem:[#allocation0]]
  $region42: #{tpu_custom_call.1} parent=0
    _
  %s8 = ssub.s32 1, %s6
  %s9 = scalar_select 0, %s8, %s6
  $region1: #{tpu_custom_call.1} parent=0
    #allocation2 [shape = 'u8[8192]{0}', space=vmem, size = 0x2000, scoped, tag = 'input window, operand 0, single buffered']
    #allocation3 [shape = 's32[1]{0}', space=sflag, size = 0x4, scoped, tag = 'scoped memory for tpu_custom_call.1']
    #allocation4 [shape = 's32[1]{0}', space=sflag, size = 0x4, scoped, tag = 'scoped memory for tpu_custom_call.1']
    #allocation5 [shape = 'u8[8192]{0}', space=vmem, size = 0x2000, scoped, tag = 'input window, operand 1, single buffered']
    #allocation6 [shape = 's32[1]{0}', space=sflag, size = 0x4, scoped, tag = 'scoped memory for tpu_custom_call.1']
    #allocation7 [shape = 'u8[16384]{0}', space=vmem, size = 0x4000, scoped, tag = 'input window, operand 3, single buffered']
    #allocation8 [shape = 'u8[8192]{0}', space=vmem, size = 0x2000, scoped, tag = 'output window, operand 0, single buffered']
    %10 = vsyncpa [#allocation3], 0
    %11 = vsyncpa [#allocation6], 0
    %12 = vsyncpa [#allocation4], 0
    // Predicated region
    $region2: #{tpu_custom_call.1} parent=1 // pred_check
      _
    $region3: #{tpu_custom_call.1} parent=1 // pred_check_branch
      %14 = sbr.rel (0) target = $region5
    $region4: #{tpu_custom_call.1} parent=1 // pred_region
      %16 = vsyncadd [#allocation3], 0
      %s17 = sshll.u32 %s0, 4
      %s18 = int_to_ptr.hbm [resolvable:$true] %s17
      %s19 = sshll.u32 [#allocation2], 4
      %s20 = int_to_ptr.vmem [resolvable:$true] %s19
      %25 = dma.hbm_to_vmem [thread:$0]  %s18, 256, %s20, [#allocation3], 128, 128, 8
    $region5: #{tpu_custom_call.1} parent=1 // pred_fallthru
      _
    // Predicated region
    $region6: #{tpu_custom_call.1} parent=1 // pred_check
      _
    $region7: #{tpu_custom_call.1} parent=1 // pred_check_branch
      %27 = sbr.rel (0) target = $region9
    $region8: #{tpu_custom_call.1} parent=1 // pred_region
      %29 = vsyncadd [#allocation6], 0
      %s30 = sshll.u32 %s1, 4
      %s31 = int_to_ptr.hbm [resolvable:$true] %s30
      %s32 = sshll.u32 [#allocation5], 4
      %s33 = int_to_ptr.vmem [resolvable:$true] %s32
      %38 = dma.hbm_to_vmem [thread:$0]  %s31, 256, %s33, [#allocation6], 64, 64, 4
    $region9: #{tpu_custom_call.1} parent=1 // pred_fallthru
      _
    // Predicated region
    $region10: #{tpu_custom_call.1} parent=1 // pred_check
      _
    $region11: #{tpu_custom_call.1} parent=1 // pred_check_branch
      %40 = sbr.rel (0) target = $region13
    $region12: #{tpu_custom_call.1} parent=1 // pred_region
      _
    $region13: #{tpu_custom_call.1} parent=1 // pred_fallthru
      _
    // Predicated region
    $region14: #{tpu_custom_call.1} parent=1 // pred_check
      _
    $region15: #{tpu_custom_call.1} parent=1 // pred_check_branch
      %42 = sbr.rel (0) target = $region17
    $region16: #{tpu_custom_call.1} parent=1 // pred_region
      %44 = vsyncadd [#allocation6], 0
      %s45 = sshll.u32 %s3, 4
      %s46 = int_to_ptr.hbm [resolvable:$true] %s45
      %s47 = sshll.u32 [#allocation7], 4
      %s48 = int_to_ptr.vmem [resolvable:$true] %s47
      %53 = dma.hbm_to_vmem [thread:$0]  %s46, 512, %s48, [#allocation6], 64, 64, 4
    $region17: #{tpu_custom_call.1} parent=1 // pred_fallthru
      _
    // Predicated region
    $region18: #{tpu_custom_call.1} parent=1 // pred_check
      _
    $region19: #{tpu_custom_call.1} parent=1 // pred_check_branch
      %55 = sbr.rel (0) target = $region21
    $region20: #{tpu_custom_call.1} parent=1 // pred_region
      _
    $region21: #{tpu_custom_call.1} parent=1 // pred_fallthru
      _
    // Predicated region
    $region22: #{tpu_custom_call.1} parent=1 // pred_check
      _
    $region23: #{tpu_custom_call.1} parent=1 // pred_check_branch
      %57 = sbr.rel (0) target = $region25
    $region24: #{tpu_custom_call.1} parent=1 // pred_region
      %59 = dma.done [#allocation3], 256
    $region25: #{tpu_custom_call.1} parent=1 // pred_fallthru
      _
    // Predicated region
    $region26: #{tpu_custom_call.1} parent=1 // pred_check
      _
    $region27: #{tpu_custom_call.1} parent=1 // pred_check_branch
      %61 = sbr.rel (0) target = $region29
    $region28: #{tpu_custom_call.1} parent=1 // pred_region
      %63 = dma.done [#allocation6], 256
    $region29: #{tpu_custom_call.1} parent=1 // pred_fallthru
      _
    // Predicated region
    $region30: #{tpu_custom_call.1} parent=1 // pred_check
      _
    $region31: #{tpu_custom_call.1} parent=1 // pred_check_branch
      %65 = sbr.rel (0) target = $region33
    $region32: #{tpu_custom_call.1} parent=1 // pred_region
      %67 = dma.done [#allocation6], 512
    $region33: #{tpu_custom_call.1} parent=1 // pred_fallthru
      _
    %v69 = vld [vmem:[#allocation2] sm:$0xff]
    %v70 = vld [vmem:[#allocation2 + $0x8] sm:$0xff]
    %v71 = vld [vmem:[#allocation5] sm:$0xf]
    %v72 = vld [vmem:[#allocation5 + $0x4] sm:$0xf]
    %v73 = vld [vmem:[#allocation5 + $0x8] sm:$0xf]
    %v74 = vld [vmem:[#allocation5 + $0xc] sm:$0xf]
    %v75 = vld [vmem:[%s2] sm:$0x1]
    %v76 = vpack.c.bf16 %v70, %v69
    %v78 = vperm.slane %v75, 0
    %v84 = vunpack.c.l.b16 %v71
    %v85 = vunpack.c.l.b16 %v72
    %v86 = vunpack.c.l.b16 %v73
    %v87 = vunpack.c.l.b16 %v74
    %v88 = vpack.c.b16 %v85, %v84
    %v89 = vpack.c.b16 %v87, %v86
    %vm92 = vcmask 261120
    %v94 = vsel %vm92, %v76, 0
    %96 = vmatpush.bf16.msra.mxu0 0
    %97 = vmatpush.bf16.msra.mxu0 0
    %98 = vmatpush.bf16.msra.mxu0 0
    %99 = vmatpush.bf16.msra.mxu0 0
    %100 = vmatpush.bf16.msra.mxu0 0
    %101 = vmatpush.bf16.msra.mxu0 0
    %102 = vmatpush.bf16.msra.mxu0 %v89
    %103 = vmatpush.bf16.msra.mxu0 %v88
    %104 = vmatmul.bf16.gmra.mxu0 %v94
    %v105 = vpop.f32.mrf.mxu0
    %v106 = vadd.f32 %v78, %v105
    %v107 = vpop.f32.mrf.mxu0
    %v108 = vadd.f32 %v78, %v107
    %109 = vdwg.mxu0
    %v110 = vmax.f32 %v106, 0.0
    %v111 = vmax.f32 %v108, 0.0
    %v112 = vld [vmem:[#allocation7] sm:$0xf]
    %v113 = vld [vmem:[#allocation7 + $0x4] sm:$0xf]
    %v114 = vld [vmem:[#allocation7 + $0x8] sm:$0xf]
    %v115 = vld [vmem:[#allocation7 + $0xc] sm:$0xf]
    %v116 = vld [vmem:[#allocation7 + $0x10] sm:$0xf]
    %v117 = vld [vmem:[#allocation7 + $0x14] sm:$0xf]
    %v118 = vld [vmem:[#allocation7 + $0x18] sm:$0xf]
    %v119 = vld [vmem:[#allocation7 + $0x1c] sm:$0xf]
    %v120 = vld [vmem:[%s4] sm:$0x1]
    %v121 = vpack.c.bf16 %v111, %v110
    %v123 = vperm.slane %v120, 0
    %v133 = vunpack.c.l.b16 %v112
    %v134 = vunpack.c.l.b16 %v113
    %v135 = vunpack.c.l.b16 %v114
    %v136 = vunpack.c.l.b16 %v115
    %v137 = vunpack.c.l.b16 %v116
    %v138 = vunpack.c.l.b16 %v117
    %v139 = vunpack.c.l.b16 %v118
    %v140 = vunpack.c.l.b16 %v119
    %v141 = vpack.c.b16 %v134, %v133
    %v142 = vpack.c.b16 %v136, %v135
    %v143 = vpack.c.b16 %v138, %v137
    %v144 = vpack.c.b16 %v140, %v139
    %vm149 = vcmask 523264
    %v151 = vsel %vm149, %v121, 0
    %153 = vmatpush.bf16.msra.mxu0 0
    %154 = vmatpush.bf16.msra.mxu0 0
    %155 = vmatpush.bf16.msra.mxu0 0
    %156 = vmatpush.bf16.msra.mxu0 0
    %157 = vmatpush.bf16.msra.mxu0 %v144
    %158 = vmatpush.bf16.msra.mxu0 %v143
    %159 = vmatpush.bf16.msra.mxu0 %v142
    %160 = vmatpush.bf16.msra.mxu0 %v141
    %161 = vmatmul.bf16.gmra.mxu0 %v151
    %v162 = vpop.f32.mrf.mxu0
    %v163 = vadd.f32 %v123, %v162
    %v164 = vpop.f32.mrf.mxu0
    %v165 = vadd.f32 %v123, %v164
    %166 = vdwg.mxu0
    %v167 = vmax.f32 %v163, 0.0
    %v168 = vmax.f32 %v165, 0.0
    %169 = vst.msk [vmem:[#allocation8] sm:$0xff] %vm149, %v167
    %170 = vst.msk [vmem:[#allocation8 + $0x8] sm:$0xff] %vm149, %v168
    // Predicated region
    $region34: #{tpu_custom_call.1} parent=1 // pred_check
      _
    $region35: #{tpu_custom_call.1} parent=1 // pred_check_branch
      %172 = sbr.rel (0) target = $region37
    $region36: #{tpu_custom_call.1} parent=1 // pred_region
      %174 = vsyncadd [#allocation4], 0
      %s175 = sshll.u32 [#allocation8], 4
      %s176 = int_to_ptr.vmem [resolvable:$true] %s175
      %s177 = sshll.u32 %s5, 4
      %s178 = int_to_ptr.hbm [resolvable:$true] %s177
      %183 = dma.vmem_to_hbm [thread:$0]  %s176, 256, %s178, [#allocation4], 128, 128, 8
    $region37: #{tpu_custom_call.1} parent=1 // pred_fallthru
      _
    // Predicated region
    $region38: #{tpu_custom_call.1} parent=1 // pred_check
      _
    $region39: #{tpu_custom_call.1} parent=1 // pred_check_branch
      %185 = sbr.rel (0) target = $region41
    $region40: #{tpu_custom_call.1} parent=1 // pred_region
      %187 = dma.done [#allocation4], 256
    $region41: #{tpu_custom_call.1} parent=1 // pred_fallthru
      _
    %188 = vsyncpa [#allocation3], 1
    %189 = vsyncpa [#allocation6], 1
    %190 = vsyncpa [#allocation4], 1

</llo_original>
